<compile_context>
chip_gen: v5e
topology: v5e:2x2
jax: 0.10.0
libtpu: 0.0.40
codegen_flags: <defaults>
</compile_context>

<pallas_src>
import functools
import math

import jax
import jax.numpy as jnp
from jax.experimental import pallas as pl
from jax.experimental.pallas import tpu as pltpu


def _phase_conv_kernel(x_ref, w_ref, b_ref, o_ref, *, width, thw):
    """One grid step = TH original rows of one batch item, all 4 output phases.

    x_ref : (1, 1, C, Wb)    flat spatial window, Wb = TH*W + 2*W + 2 (halo'd)
    w_ref : (9, 4*C, C)      w_ref[ro*3 + co][(py*2+px)*C + o, i]
    b_ref : (4*C, 1)
    o_ref : (1, 4*C, TH*W)   phase-major output block
    """
    c4 = o_ref.shape[1]
    slab = x_ref[0, 0]                                         # (C, Wb) f32

    # Column-validity masks over the TH*W output positions (zero padding of the
    # conv): tap at col offset -1 is invalid at ix==0, +1 invalid at ix==W-1.
    lane = jax.lax.broadcasted_iota(jnp.int32, (1, thw), 1)
    col = lane % width
    mask_l = col > 0
    mask_r = col < (width - 1)

    acc = jnp.zeros((c4, thw), jnp.float32)
    for ro in range(3):                                        # tap row offset-1
        for co in range(3):                                    # tap col offset-1
            s = ro * width + co
            t = slab[:, s:s + thw]                             # (C, TH*W)
            if co == 0:
                t = jnp.where(mask_l, t, 0.0)
            elif co == 2:
                t = jnp.where(mask_r, t, 0.0)
            acc = acc + jnp.dot(
                w_ref[ro * 3 + co].astype(jnp.float32),
                t.astype(jnp.float32),
                preferred_element_type=jnp.float32,
            )
    o_ref[0, :, :] = (acc + b_ref[...].astype(jnp.float32)).astype(o_ref.dtype)


def _pick_row_tile(h, w, c, max_bytes=4 << 20):
    """Largest row tile TH dividing H with lane-dense blocks and bounded VMEM."""
    cands = [th for th in range(1, h + 1)
             if h % th == 0 and (((th * w) % 128 == 0) or th == h)]

    def blk_bytes(th):
        thw = th * w
        # double-buffered input window + double-buffered 4-phase output block
        return (2 * (thw + 2 * w + 2) * c + 2 * 4 * c * thw) * 4

    fitting = [th for th in cands if blk_bytes(th) <= max_bytes]
    return max(fitting) if fitting else min(cands)


def _upsample2x_conv3x3(x, weight_oihw, bias):
    """x: (N, C, H, W) f32, weight: (C, C, 3, 3) OIHW, bias: (C,) -> (N, C, 2H, 2W)."""
    n, c, h, w = x.shape
    th = _pick_row_tile(h, w, c)
    nb = h // th
    thw = th * w
    wb = thw + 2 * w + 2

    # ---- glue: per-block flat windows with a (W+1)-element zero halo ----------
    # (original-resolution data only; the 4x upsampled image is never built)
    flat = x.reshape(n, c, h * w)
    flat_pad = jnp.pad(flat, ((0, 0), (0, 0), (w + 1, w + 1)))
    windows = jnp.stack(
        [flat_pad[:, :, rb * thw: rb * thw + wb] for rb in range(nb)], axis=1
    )                                                          # (N, nb, C, Wb)

    # ---- phase weights: 3x3 conv on 2x nearest-upsample == four 2x2 convs -----
    # mix[p, t, k] = 1 iff floor((p + k - 1) / 2) == t - 1
    # (phase p in {0,1}, effective tap t in {-1,0,+1}+1, original kernel index k)
    m0 = jnp.array([[1., 0., 0.], [0., 1., 1.], [0., 0., 0.]], jnp.float32)
    m1 = jnp.array([[0., 0., 0.], [1., 1., 0.], [0., 0., 1.]], jnp.float32)
    mix = jnp.stack([m0, m1])                                  # (2, 3, 3)
    w9 = jnp.einsum('prk,qsl,oikl->rspqoi', mix, mix, weight_oihw)
    w9 = w9.reshape(9, 4 * c, c)       # [ro*3+co][(py*2+px)*C + o, i]
    b4 = jnp.tile(bias, 4).reshape(4 * c, 1)

    kernel = functools.partial(_phase_conv_kernel, width=w, thw=thw)

    out_flat = pl.pallas_call(
        kernel,
        out_shape=jax.ShapeDtypeStruct((n, 4 * c, h * w), x.dtype),
        grid_spec=pltpu.PrefetchScalarGridSpec(
            num_scalar_prefetch=0,
            grid=(n, nb),
            in_specs=[
                pl.BlockSpec((1, 1, c, wb), lambda b, rb: (b, rb, 0, 0)),
                pl.BlockSpec((9, 4 * c, c), lambda b, rb: (0, 0, 0)),
                pl.BlockSpec((4 * c, 1), lambda b, rb: (0, 0)),
            ],
            out_specs=pl.BlockSpec((1, 4 * c, thw), lambda b, rb: (b, 0, rb)),
        ),
        compiler_params=pltpu.CompilerParams(
            dimension_semantics=("parallel", "parallel")),
    )(windows, w9, b4)

    # ---- recombine phases: (b, py, px, c, iy, ix) -> (b, c, 2H, 2W) -----------
    out = out_flat.reshape(n, 2, 2, c, h, w)
    out = jnp.transpose(out, (0, 3, 4, 1, 5, 2))               # (b, c, iy, py, ix, px)
    return out.reshape(n, c, 2 * h, 2 * w)


class Upsample:
    """JAX/Pallas port of medical_diffusion Upsample (spatial_dims=2)."""

    def __init__(self, in_channels, with_conv, spatial_dims=2, *, key):
        assert spatial_dims == 2, "only spatial_dims=2 implemented"
        self.with_conv = with_conv
        self.in_channels = in_channels
        if with_conv:
            kw, kb = jax.random.split(key, 2)
            fan_in = in_channels * 3 * 3
            bound = 1.0 / math.sqrt(fan_in)
            # deterministic synthetic init (PyTorch Conv2d default-style uniform)
            self.weight = jax.random.uniform(
                kw, (in_channels, in_channels, 3, 3), jnp.float32, -bound, bound)
            self.bias = jax.random.uniform(
                kb, (in_channels,), jnp.float32, -bound, bound)

    def __call__(self, x):
        if not self.with_conv:
            # nearest 2x upsample only: pure replication, no FLOPs -> plain JAX
            return jnp.repeat(jnp.repeat(x, 2, axis=2), 2, axis=3)
        return _upsample2x_conv3x3(x, self.weight, self.bias)


if __name__ == "__main__":
    key = jax.random.PRNGKey(0)
    kx, kparams = jax.random.split(key, 2)

    N, C, H, W = 2, 4, 16, 16
    x = jax.random.normal(kx, (N, C, H, W), jnp.float32)

    model = Upsample(in_channels=C, with_conv=True, spatial_dims=2, key=kparams)

    y = model(x)
    y = jax.block_until_ready(y)
    assert y.shape == (N, C, 2 * H, 2 * W), y.shape

    # reference: nearest upsample + lax conv (NCHW / OIHW), padding=1, stride=1
    x_up = jnp.repeat(jnp.repeat(x, 2, axis=2), 2, axis=3)
    ref = jax.lax.conv_general_dilated(
        x_up, model.weight, window_strides=(1, 1), padding=((1, 1), (1, 1)),
        dimension_numbers=("NCHW", "OIHW", "NCHW"),
    ) + model.bias[None, :, None, None]

    assert jnp.allclose(y, ref, atol=1e-4, rtol=1e-4), float(jnp.abs(y - ref).max())

    # also check the no-conv path (pure nearest upsample)
    model_nc = Upsample(in_channels=C, with_conv=False, spatial_dims=2, key=kparams)
    y_nc = jax.block_until_ready(model_nc(x))
    assert jnp.array_equal(y_nc, x_up)

    print("KERNEL_OK")
</pallas_src>

<mosaic_0001>
module attributes {stable_mosaic.version = 11 : i64} {
  func.func @_phase_conv_kernel(%arg0: i32, %arg1: i32, %arg2: memref<1x1x4x290xf32, #tpu.memory_space<vmem>>, %arg3: memref<9x16x4xf32, #tpu.memory_space<vmem>>, %arg4: memref<16x1xf32, #tpu.memory_space<vmem>>, %arg5: memref<1x16x256xf32, #tpu.memory_space<vmem>>) attributes {dimension_semantics = [#tpu.dimension_semantics<parallel>, #tpu.dimension_semantics<parallel>], iteration_bounds = array<i64: 2, 1>, scalar_prefetch = 0 : i64, scratch_operands = 0 : i64, tpu.core_type = #tpu.core_type<tc>, window_params = [{transform_indices = @transform_0, window_bounds = array<i64: 1, 1, 4, 290>}, {pipeline_mode = #tpu.pipeline_mode<synchronous>, transform_indices = @transform_1, window_bounds = array<i64: 9, 16, 4>}, {pipeline_mode = #tpu.pipeline_mode<synchronous>, transform_indices = @transform_2, window_bounds = array<i64: 16, 1>}, {transform_indices = @transform_3, window_bounds = array<i64: 1, 16, 256>}]} {
    %c0 = arith.constant 0 : index
    %c0_0 = arith.constant 0 : index
    %c0_1 = arith.constant 0 : index
    %c0_2 = arith.constant 0 : index
    %0 = vector.load %arg2[%c0, %c0_0, %c0_1, %c0_2] : memref<1x1x4x290xf32, #tpu.memory_space<vmem>>, vector<1x1x4x290xf32>
    %1 = vector.shape_cast %0 : vector<1x1x4x290xf32> to vector<4x290xf32>
    %2 = tpu.iota {dimensions = array<i32: 1>} : vector<1x256xi32>
    %c16_i32 = arith.constant 16 : i32
    %c0_i32 = arith.constant 0 : i32
    %3 = arith.cmpi eq, %c16_i32, %c0_i32 : i32
    %c1_i32 = arith.constant 1 : i32
    %4 = arith.select %3, %c1_i32, %c16_i32 : i32
    %5 = vector.broadcast %4 : i32 to vector<1x256xi32>
    %6 = arith.remsi %2, %5 : vector<1x256xi32>
    %c0_i32_3 = arith.constant 0 : i32
    %7 = vector.broadcast %c0_i32_3 : i32 to vector<1x256xi32>
    %8 = arith.cmpi ne, %6, %7 : vector<1x256xi32>
    %c0_i32_4 = arith.constant 0 : i32
    %9 = vector.broadcast %c0_i32_4 : i32 to vector<1x256xi32>
    %10 = arith.cmpi slt, %6, %9 : vector<1x256xi32>
    %c0_i32_5 = arith.constant 0 : i32
    %11 = arith.cmpi slt, %4, %c0_i32_5 : i32
    %12 = vector.broadcast %11 : i1 to vector<1x256xi1>
    %13 = vector.broadcast %12 : vector<1x256xi1> to vector<1x256xi1>
    %14 = arith.xori %10, %13 : vector<1x256xi1>
    %15 = arith.andi %14, %8 : vector<1x256xi1>
    %16 = vector.broadcast %4 : i32 to vector<1x256xi32>
    %17 = arith.addi %6, %16 : vector<1x256xi32>
    %18 = arith.select %15, %17, %6 : vector<1x256xi1>, vector<1x256xi32>
    %c0_i32_6 = arith.constant 0 : i32
    %19 = vector.broadcast %c0_i32_6 : i32 to vector<1x256xi32>
    %20 = arith.cmpi sgt, %18, %19 : vector<1x256xi32>
    %c15_i32 = arith.constant 15 : i32
    %21 = vector.broadcast %c15_i32 : i32 to vector<1x256xi32>
    %22 = arith.cmpi slt, %18, %21 : vector<1x256xi32>
    %cst = arith.constant 0.000000e+00 : f32
    %23 = vector.broadcast %cst : f32 to vector<16x256xf32>
    %24 = vector.extract_strided_slice %1 {offsets = [0, 0], sizes = [4, 256], strides = [1, 1]} : vector<4x290xf32> to vector<4x256xf32>
    %cst_7 = arith.constant 0.000000e+00 : f32
    %25 = vector.shape_cast %20 : vector<1x256xi1> to vector<1x256xi1>
    %26 = vector.broadcast %25 : vector<1x256xi1> to vector<4x256xi1>
    %27 = vector.broadcast %cst_7 : f32 to vector<4x256xf32>
    %28 = arith.select %26, %24, %27 : vector<4x256xi1>, vector<4x256xf32>
    %c0_8 = arith.constant 0 : index
    %c0_9 = arith.constant 0 : index
    %c0_10 = arith.constant 0 : index
    %29 = vector.load %arg3[%c0_8, %c0_9, %c0_10] : memref<9x16x4xf32, #tpu.memory_space<vmem>>, vector<1x16x4xf32>
    %30 = vector.shape_cast %29 : vector<1x16x4xf32> to vector<16x4xf32>
    %cst_11 = arith.constant dense<0.000000e+00> : vector<16x256xf32>
    %31 = tpu.matmul %30, %28, %cst_11 {dimension_numbers = #tpu.dot_dimension_numbers<[1], [0], [0], [1], [0, 0, 1, 1], [], []>} : vector<16x4xf32>, vector<4x256xf32>, vector<16x256xf32> -> vector<16x256xf32>
    %32 = arith.addf %23, %31 : vector<16x256xf32>
    %33 = vector.extract_strided_slice %1 {offsets = [0, 1], sizes = [4, 256], strides = [1, 1]} : vector<4x290xf32> to vector<4x256xf32>
    %c1 = arith.constant 1 : index
    %c0_12 = arith.constant 0 : index
    %c0_13 = arith.constant 0 : index
    %34 = vector.load %arg3[%c1, %c0_12, %c0_13] : memref<9x16x4xf32, #tpu.memory_space<vmem>>, vector<1x16x4xf32>
    %35 = vector.shape_cast %34 : vector<1x16x4xf32> to vector<16x4xf32>
    %cst_14 = arith.constant dense<0.000000e+00> : vector<16x256xf32>
    %36 = tpu.matmul %35, %33, %cst_14 {dimension_numbers = #tpu.dot_dimension_numbers<[1], [0], [0], [1], [0, 0, 1, 1], [], []>} : vector<16x4xf32>, vector<4x256xf32>, vector<16x256xf32> -> vector<16x256xf32>
    %37 = arith.addf %32, %36 : vector<16x256xf32>
    %38 = vector.extract_strided_slice %1 {offsets = [0, 2], sizes = [4, 256], strides = [1, 1]} : vector<4x290xf32> to vector<4x256xf32>
    %cst_15 = arith.constant 0.000000e+00 : f32
    %39 = vector.shape_cast %22 : vector<1x256xi1> to vector<1x256xi1>
    %40 = vector.broadcast %39 : vector<1x256xi1> to vector<4x256xi1>
    %41 = vector.broadcast %cst_15 : f32 to vector<4x256xf32>
    %42 = arith.select %40, %38, %41 : vector<4x256xi1>, vector<4x256xf32>
    %c2 = arith.constant 2 : index
    %c0_16 = arith.constant 0 : index
    %c0_17 = arith.constant 0 : index
    %43 = vector.load %arg3[%c2, %c0_16, %c0_17] : memref<9x16x4xf32, #tpu.memory_space<vmem>>, vector<1x16x4xf32>
    %44 = vector.shape_cast %43 : vector<1x16x4xf32> to vector<16x4xf32>
    %cst_18 = arith.constant dense<0.000000e+00> : vector<16x256xf32>
    %45 = tpu.matmul %44, %42, %cst_18 {dimension_numbers = #tpu.dot_dimension_numbers<[1], [0], [0], [1], [0, 0, 1, 1], [], []>} : vector<16x4xf32>, vector<4x256xf32>, vector<16x256xf32> -> vector<16x256xf32>
    %46 = arith.addf %37, %45 : vector<16x256xf32>
    %47 = vector.extract_strided_slice %1 {offsets = [0, 16], sizes = [4, 256], strides = [1, 1]} : vector<4x290xf32> to vector<4x256xf32>
    %cst_19 = arith.constant 0.000000e+00 : f32
    %48 = vector.shape_cast %20 : vector<1x256xi1> to vector<1x256xi1>
    %49 = vector.broadcast %48 : vector<1x256xi1> to vector<4x256xi1>
    %50 = vector.broadcast %cst_19 : f32 to vector<4x256xf32>
    %51 = arith.select %49, %47, %50 : vector<4x256xi1>, vector<4x256xf32>
    %c3 = arith.constant 3 : index
    %c0_20 = arith.constant 0 : index
    %c0_21 = arith.constant 0 : index
    %52 = vector.load %arg3[%c3, %c0_20, %c0_21] : memref<9x16x4xf32, #tpu.memory_space<vmem>>, vector<1x16x4xf32>
    %53 = vector.shape_cast %52 : vector<1x16x4xf32> to vector<16x4xf32>
    %cst_22 = arith.constant dense<0.000000e+00> : vector<16x256xf32>
    %54 = tpu.matmul %53, %51, %cst_22 {dimension_numbers = #tpu.dot_dimension_numbers<[1], [0], [0], [1], [0, 0, 1, 1], [], []>} : vector<16x4xf32>, vector<4x256xf32>, vector<16x256xf32> -> vector<16x256xf32>
    %55 = arith.addf %46, %54 : vector<16x256xf32>
    %56 = vector.extract_strided_slice %1 {offsets = [0, 17], sizes = [4, 256], strides = [1, 1]} : vector<4x290xf32> to vector<4x256xf32>
    %c4 = arith.constant 4 : index
    %c0_23 = arith.constant 0 : index
    %c0_24 = arith.constant 0 : index
    %57 = vector.load %arg3[%c4, %c0_23, %c0_24] : memref<9x16x4xf32, #tpu.memory_space<vmem>>, vector<1x16x4xf32>
    %58 = vector.shape_cast %57 : vector<1x16x4xf32> to vector<16x4xf32>
    %cst_25 = arith.constant dense<0.000000e+00> : vector<16x256xf32>
    %59 = tpu.matmul %58, %56, %cst_25 {dimension_numbers = #tpu.dot_dimension_numbers<[1], [0], [0], [1], [0, 0, 1, 1], [], []>} : vector<16x4xf32>, vector<4x256xf32>, vector<16x256xf32> -> vector<16x256xf32>
    %60 = arith.addf %55, %59 : vector<16x256xf32>
    %61 = vector.extract_strided_slice %1 {offsets = [0, 18], sizes = [4, 256], strides = [1, 1]} : vector<4x290xf32> to vector<4x256xf32>
    %cst_26 = arith.constant 0.000000e+00 : f32
    %62 = vector.shape_cast %22 : vector<1x256xi1> to vector<1x256xi1>
    %63 = vector.broadcast %62 : vector<1x256xi1> to vector<4x256xi1>
    %64 = vector.broadcast %cst_26 : f32 to vector<4x256xf32>
    %65 = arith.select %63, %61, %64 : vector<4x256xi1>, vector<4x256xf32>
    %c5 = arith.constant 5 : index
    %c0_27 = arith.constant 0 : index
    %c0_28 = arith.constant 0 : index
    %66 = vector.load %arg3[%c5, %c0_27, %c0_28] : memref<9x16x4xf32, #tpu.memory_space<vmem>>, vector<1x16x4xf32>
    %67 = vector.shape_cast %66 : vector<1x16x4xf32> to vector<16x4xf32>
    %cst_29 = arith.constant dense<0.000000e+00> : vector<16x256xf32>
    %68 = tpu.matmul %67, %65, %cst_29 {dimension_numbers = #tpu.dot_dimension_numbers<[1], [0], [0], [1], [0, 0, 1, 1], [], []>} : vector<16x4xf32>, vector<4x256xf32>, vector<16x256xf32> -> vector<16x256xf32>
    %69 = arith.addf %60, %68 : vector<16x256xf32>
    %70 = vector.extract_strided_slice %1 {offsets = [0, 32], sizes = [4, 256], strides = [1, 1]} : vector<4x290xf32> to vector<4x256xf32>
    %cst_30 = arith.constant 0.000000e+00 : f32
    %71 = vector.shape_cast %20 : vector<1x256xi1> to vector<1x256xi1>
    %72 = vector.broadcast %71 : vector<1x256xi1> to vector<4x256xi1>
    %73 = vector.broadcast %cst_30 : f32 to vector<4x256xf32>
    %74 = arith.select %72, %70, %73 : vector<4x256xi1>, vector<4x256xf32>
    %c6 = arith.constant 6 : index
    %c0_31 = arith.constant 0 : index
    %c0_32 = arith.constant 0 : index
    %75 = vector.load %arg3[%c6, %c0_31, %c0_32] : memref<9x16x4xf32, #tpu.memory_space<vmem>>, vector<1x16x4xf32>
    %76 = vector.shape_cast %75 : vector<1x16x4xf32> to vector<16x4xf32>
    %cst_33 = arith.constant dense<0.000000e+00> : vector<16x256xf32>
    %77 = tpu.matmul %76, %74, %cst_33 {dimension_numbers = #tpu.dot_dimension_numbers<[1], [0], [0], [1], [0, 0, 1, 1], [], []>} : vector<16x4xf32>, vector<4x256xf32>, vector<16x256xf32> -> vector<16x256xf32>
    %78 = arith.addf %69, %77 : vector<16x256xf32>
    %79 = vector.extract_strided_slice %1 {offsets = [0, 33], sizes = [4, 256], strides = [1, 1]} : vector<4x290xf32> to vector<4x256xf32>
    %c7 = arith.constant 7 : index
    %c0_34 = arith.constant 0 : index
    %c0_35 = arith.constant 0 : index
    %80 = vector.load %arg3[%c7, %c0_34, %c0_35] : memref<9x16x4xf32, #tpu.memory_space<vmem>>, vector<1x16x4xf32>
    %81 = vector.shape_cast %80 : vector<1x16x4xf32> to vector<16x4xf32>
    %cst_36 = arith.constant dense<0.000000e+00> : vector<16x256xf32>
    %82 = tpu.matmul %81, %79, %cst_36 {dimension_numbers = #tpu.dot_dimension_numbers<[1], [0], [0], [1], [0, 0, 1, 1], [], []>} : vector<16x4xf32>, vector<4x256xf32>, vector<16x256xf32> -> vector<16x256xf32>
    %83 = arith.addf %78, %82 : vector<16x256xf32>
    %84 = vector.extract_strided_slice %1 {offsets = [0, 34], sizes = [4, 256], strides = [1, 1]} : vector<4x290xf32> to vector<4x256xf32>
    %cst_37 = arith.constant 0.000000e+00 : f32
    %85 = vector.shape_cast %22 : vector<1x256xi1> to vector<1x256xi1>
    %86 = vector.broadcast %85 : vector<1x256xi1> to vector<4x256xi1>
    %87 = vector.broadcast %cst_37 : f32 to vector<4x256xf32>
    %88 = arith.select %86, %84, %87 : vector<4x256xi1>, vector<4x256xf32>
    %c8 = arith.constant 8 : index
    %c0_38 = arith.constant 0 : index
    %c0_39 = arith.constant 0 : index
    %89 = vector.load %arg3[%c8, %c0_38, %c0_39] : memref<9x16x4xf32, #tpu.memory_space<vmem>>, vector<1x16x4xf32>
    %90 = vector.shape_cast %89 : vector<1x16x4xf32> to vector<16x4xf32>
    %cst_40 = arith.constant dense<0.000000e+00> : vector<16x256xf32>
    %91 = tpu.matmul %90, %88, %cst_40 {dimension_numbers = #tpu.dot_dimension_numbers<[1], [0], [0], [1], [0, 0, 1, 1], [], []>} : vector<16x4xf32>, vector<4x256xf32>, vector<16x256xf32> -> vector<16x256xf32>
    %92 = arith.addf %83, %91 : vector<16x256xf32>
    %c0_41 = arith.constant 0 : index
    %c0_42 = arith.constant 0 : index
    %93 = vector.load %arg4[%c0_41, %c0_42] : memref<16x1xf32, #tpu.memory_space<vmem>>, vector<16x1xf32>
    %94 = vector.broadcast %93 : vector<16x1xf32> to vector<16x256xf32>
    %95 = arith.addf %92, %94 : vector<16x256xf32>
    %c0_43 = arith.constant 0 : index
    %c0_44 = arith.constant 0 : index
    %c0_45 = arith.constant 0 : index
    %96 = vector.load %arg5[%c0_43, %c0_44, %c0_45] : memref<1x16x256xf32, #tpu.memory_space<vmem>>, vector<1x16x256xf32>
    %97 = vector.shape_cast %96 : vector<1x16x256xf32> to vector<16x256xf32>
    %98 = vector.shape_cast %95 : vector<16x256xf32> to vector<1x16x256xf32>
    tpu.vector_store %arg5[%c0_43, %c0_44, %c0_45], %98 {strides = array<i32>} : memref<1x16x256xf32, #tpu.memory_space<vmem>>, vector<1x16x256xf32>,
    return
  }
  func.func @transform_0(%arg0: i32, %arg1: i32) -> (i32, i32, i32, i32) {
    %c0_i32 = arith.constant 0 : i32
    %c0_i32_0 = arith.constant 0 : i32
    %c0_i32_1 = arith.constant 0 : i32
    return %arg0, %arg1, %c0_i32, %c0_i32_0 : i32, i32, i32, i32
  }
  func.func @transform_1(%arg0: i32, %arg1: i32) -> (i32, i32, i32) {
    %c0_i32 = arith.constant 0 : i32
    %c0_i32_0 = arith.constant 0 : i32
    %c0_i32_1 = arith.constant 0 : i32
    %c0_i32_2 = arith.constant 0 : i32
    return %c0_i32, %c0_i32_0, %c0_i32_1 : i32, i32, i32
  }
  func.func @transform_2(%arg0: i32, %arg1: i32) -> (i32, i32) {
    %c0_i32 = arith.constant 0 : i32
    %c0_i32_0 = arith.constant 0 : i32
    %c0_i32_1 = arith.constant 0 : i32
    return %c0_i32, %c0_i32_0 : i32, i32
  }
  func.func @transform_3(%arg0: i32, %arg1: i32) -> (i32, i32, i32) {
    %c0_i32 = arith.constant 0 : i32
    %c0_i32_0 = arith.constant 0 : i32
    return %arg0, %c0_i32, %arg1 : i32, i32, i32
  }
}

</mosaic_0001>

<llo_original>
// kernel: tpu_custom_call.1
$region0: #{tpu_custom_call.1}
  #allocation0 [shape = 'u32[]', space=smem, size = 0x4, offset = 0x4, fixed_abs, tag = 'smem constant byte address 0x4 - core index']
  #allocation1 [shape = 'u32[72,128]{1,0:T(1,128)}', space=vmem, size = 0x9000, scoped, tag = 'internal scratch']
  %s0 = inlined_call_operand.vmem [shape: f32[2,1,4,290], index: 0, kind: input, shape index: {}]
  %s1 = inlined_call_operand.vmem [shape: f32[9,16,4], index: 1, kind: input, shape index: {}]
  %s2 = inlined_call_operand.vmem [shape: f32[16,1], index: 2, kind: input, shape index: {}]
  %s3 = inlined_call_operand.hbm [shape: f32[2,16,256], index: 3, kind: output, shape index: {}]
  %s4 = sld [smem:[#allocation0]]
  $region45: #{tpu_custom_call.1} parent=0
    _
  %s6 = ssub.s32 1, %s4
  %s7 = scalar_select 0, %s6, %s4
  $region1: #{tpu_custom_call.1} parent=0
    #allocation2 [shape = 'u8[32768]{0}', space=vmem, size = 0x8000, scoped, tag = 'output window, operand 0']
    #allocation3 [shape = 's32[2]{0}', space=sflag, size = 0x8, scoped, tag = 'scoped memory for tpu_custom_call.1']
    %8 = vsyncpa [#allocation3], 0
    %s9 = scalar_lea.sflag [#allocation3], 1
    %10 = vsyncpa %s9, 0
    loop: start=0, step=1, limit=4
    $region2: #{tpu_custom_call.1} parent=1 // loop_pre_header
      _
    $region3: #{tpu_custom_call.1} parent=1 // loop_header
      %s12 = sphi 0, %s16
      %p13 = scmp.ge.s32.totalorder %s12, 4
      %s19 = sphi 0, %s31
      %s20 = sphi 0, %s27
      %s21 = sphi 0, %s19
      %s22 = sphi 0, %s20
      %s23 = sphi 0, %s21
      %s24 = sphi 0, %s22
      %s36 = sphi 0, %s38
      %s39 = sphi 0, %s36
      %s40 = sphi 0, %s39
      %s56 = sphi 0, %s40
      %s60 = sphi 0, %s60
      %s62 = sphi 0, %s60
      %s63 = sphi 0, %s62
      %s77 = sphi 0, %s63
      %s81 = sphi 0, %s81
      %s83 = sphi 0, %s81
      %s84 = sphi 0, %s83
      %s98 = sphi 0, %s84
      %s106 = sphi 0, %s108
      %s109 = sphi 0, %s106
      %s110 = sphi 0, %s109
      %s126 = sphi 0, %s110
    $region4: #{tpu_custom_call.1} parent=1 // loop_header_branch
      %15 = sbr.rel (%p13) target = $region8
    $region5: #{tpu_custom_call.1} parent=1 // loop_body
      %s17 = ssub.s32 %s12, 1
      %s18 = ssub.s32 %s12, 2
      %s25 = sadd.s32 1, %s20
      %p26 = scmp.ge.s32.totalorder %s25, 1
      %s27 = scalar_select %p26, 0, %s25
      %s28 = sadd.s32 1, %s19
      %s29 = scalar_select %p26, %s28, %s19
      %p30 = scmp.ge.s32.totalorder %s29, 2
      %s31 = scalar_select %p30, 0, %s29
      %s32 = ssub.s32 %s19, %s31
      %s33 = ssub.s32 %s20, %s27
      %s34 = sor.u32 %s32, %s33
      %p35 = scmp.eq.s32.totalorder %s34, 0
      %s37 = sadd.s32 %s36, 1
      %s38 = scalar_select %p35, %s36, %s37
      %p41 = pneg %p35
      %p42 = scmp.eq.s32.totalorder %s12, 1
      %p43 = por %p41, %p42
      %p44 = scmp.ne.s32.totalorder %s36, %s39
      %p45 = scmp.eq.s32.totalorder %s12, 0
      %p46 = por %p44, %p45
      %p47 = scmp.ne.s32.totalorder %s36, %s39
      %p48 = scmp.eq.s32.totalorder %s17, 1
      %p49 = por %p47, %p48
      %p50 = scmp.ne.s32.totalorder %s39, %s40
      %p51 = scmp.eq.s32.totalorder %s17, 0
      %p52 = por %p50, %p51
      %p53 = scmp.ne.s32.totalorder %s39, %s40
      %p54 = scmp.eq.s32.totalorder %s18, 1
      %p55 = por %p53, %p54
      %p57 = scmp.ne.s32.totalorder %s40, %s56
      %p58 = scmp.eq.s32.totalorder %s18, 0
      %p59 = por %p57, %p58
      %s61 = sadd.s32 %s60, 1
      %p64 = scmp.eq.s32.totalorder %s12, 1
      %p65 = scmp.ne.s32.totalorder %s60, %s62
      %p66 = scmp.eq.s32.totalorder %s12, 0
      %p67 = por %p65, %p66
      %p68 = scmp.ne.s32.totalorder %s60, %s62
      %p69 = scmp.eq.s32.totalorder %s17, 1
      %p70 = por %p68, %p69
      %p71 = scmp.ne.s32.totalorder %s62, %s63
      %p72 = scmp.eq.s32.totalorder %s17, 0
      %p73 = por %p71, %p72
      %p74 = scmp.ne.s32.totalorder %s62, %s63
      %p75 = scmp.eq.s32.totalorder %s18, 1
      %p76 = por %p74, %p75
      %p78 = scmp.ne.s32.totalorder %s63, %s77
      %p79 = scmp.eq.s32.totalorder %s18, 0
      %p80 = por %p78, %p79
      %s82 = sadd.s32 %s81, 1
      %p85 = scmp.eq.s32.totalorder %s12, 1
      %p86 = scmp.ne.s32.totalorder %s81, %s83
      %p87 = scmp.eq.s32.totalorder %s12, 0
      %p88 = por %p86, %p87
      %p89 = scmp.ne.s32.totalorder %s81, %s83
      %p90 = scmp.eq.s32.totalorder %s17, 1
      %p91 = por %p89, %p90
      %p92 = scmp.ne.s32.totalorder %s83, %s84
      %p93 = scmp.eq.s32.totalorder %s17, 0
      %p94 = por %p92, %p93
      %p95 = scmp.ne.s32.totalorder %s83, %s84
      %p96 = scmp.eq.s32.totalorder %s18, 1
      %p97 = por %p95, %p96
      %p99 = scmp.ne.s32.totalorder %s84, %s98
      %p100 = scmp.eq.s32.totalorder %s18, 0
      %p101 = por %p99, %p100
      %s102 = ssub.s32 %s19, %s31
      %s103 = ssub.s32 %s20, %s27
      %s104 = sor.u32 %s102, %s103
      %p105 = scmp.eq.s32.totalorder %s104, 0
      %s107 = sadd.s32 %s106, 1
      %s108 = scalar_select %p105, %s106, %s107
      %p111 = pneg %p105
      %p112 = scmp.eq.s32.totalorder %s12, 1
      %p113 = por %p111, %p112
      %p114 = scmp.ne.s32.totalorder %s106, %s109
      %p115 = scmp.eq.s32.totalorder %s12, 0
      %p116 = por %p114, %p115
      %p117 = scmp.ne.s32.totalorder %s106, %s109
      %p118 = scmp.eq.s32.totalorder %s17, 1
      %p119 = por %p117, %p118
      %p120 = scmp.ne.s32.totalorder %s109, %s110
      %p121 = scmp.eq.s32.totalorder %s17, 0
      %p122 = por %p120, %p121
      %p123 = scmp.ne.s32.totalorder %s109, %s110
      %p124 = scmp.eq.s32.totalorder %s18, 1
      %p125 = por %p123, %p124
      %p127 = scmp.ne.s32.totalorder %s110, %s126
      %p128 = scmp.eq.s32.totalorder %s18, 0
      %p129 = por %p127, %p128
      %p130 = scmp.le.s32.totalorder 1, %s12
      %p131 = scmp.lt.s32.totalorder %s12, 3
      %p132 = pnand %p130, %p131
      %p133 = pneg %p132
      // Predicated region
      $region9: #{tpu_custom_call.1} parent=5 // pred_check
        _
      $region10: #{tpu_custom_call.1} parent=5 // pred_check_branch
        %135 = sbr.rel (%p132) target = $region12
      $region11: #{tpu_custom_call.1} parent=5 // pred_region
        %s136 = ssub.s32 %s12, 1
        // Predicated region
        $region13: #{tpu_custom_call.1} parent=11 // pred_check
          %p137 = pneg %p73
        $region14: #{tpu_custom_call.1} parent=11 // pred_check_branch
          %139 = sbr.rel (%p137) target = $region16
        $region15: #{tpu_custom_call.1} parent=11 // pred_region
          _
        $region16: #{tpu_custom_call.1} parent=11 // pred_fallthru
          _
        // Predicated region
        $region17: #{tpu_custom_call.1} parent=11 // pred_check
          %p140 = pneg %p94
        $region18: #{tpu_custom_call.1} parent=11 // pred_check_branch
          %142 = sbr.rel (%p140) target = $region20
        $region19: #{tpu_custom_call.1} parent=11 // pred_region
          _
        $region20: #{tpu_custom_call.1} parent=11 // pred_fallthru
          _
      $region12: #{tpu_custom_call.1} parent=5 // pred_fallthru
        _
      %p143 = scmp.lt.s32.totalorder %s12, 2
      // Predicated region
      $region21: #{tpu_custom_call.1} parent=5 // pred_check
        %p144 = pneg %p143
      $region22: #{tpu_custom_call.1} parent=5 // pred_check_branch
        %146 = sbr.rel (%p144) target = $region24
      $region23: #{tpu_custom_call.1} parent=5 // pred_region
        // Predicated region
        $region25: #{tpu_custom_call.1} parent=23 // pred_check
          %p147 = pneg %p46
        $region26: #{tpu_custom_call.1} parent=23 // pred_check_branch
          %149 = sbr.rel (%p147) target = $region28
        $region27: #{tpu_custom_call.1} parent=23 // pred_region
          %p150 = scmp.lt.s32.totalorder %s19, 1
          %s151 = scalar_select %p150, %s19, 1
          %p152 = scmp.lt.s32.totalorder %s20, 0
          %s153 = scalar_select %p152, %s20, 0
          %s154 = smul.addr %s153, 3
          %s155 = smul.addr %s151, 3
          %s156 = sadd.s32 %s154, %s155
          %s157 = smul.addr %s156, 4
          %s158 = scalar_lea.vmem %s0, %s157
        $region28: #{tpu_custom_call.1} parent=23 // pred_fallthru
          _
      $region24: #{tpu_custom_call.1} parent=5 // pred_fallthru
        _
      %p159 = scmp.le.s32.totalorder 1, %s12
      %p160 = scmp.lt.s32.totalorder %s12, 3
      %p161 = pnand %p159, %p160
      %p162 = pneg %p161
      // Predicated region
      $region29: #{tpu_custom_call.1} parent=5 // pred_check
        _
      $region30: #{tpu_custom_call.1} parent=5 // pred_check_branch
        %164 = sbr.rel (%p161) target = $region32
      $region31: #{tpu_custom_call.1} parent=5 // pred_region
        %s165 = ssub.s32 %s12, 1
        %p166 = scmp.lt.s32.totalorder %s21, 1
        %s167 = scalar_select %p166, %s21, 1
        %p168 = scmp.lt.s32.totalorder %s22, 0
        %s169 = scalar_select %p168, %s22, 0
        %s170 = smul.addr %s169, 3
        %s171 = smul.addr %s167, 3
        %s172 = sadd.s32 %s170, %s171
        %s173 = smul.addr %s172, 4
        %s174 = scalar_lea.vmem %s0, %s173
        %p175 = pneg %p52
        %p176 = pneg %p49
        %p177 = pneg %p73
        %p178 = pneg %p70
        %p179 = pneg %p94
        %p180 = pneg %p91
        %p181 = pneg %p122
        %p182 = pneg %p119
        %s183 = sand.u32 %s109, 1
        %s184 = scalar_lea.sflag [#allocation3], %s183
        %s185 = sand.u32 %s109, 1
        %s186 = smul.addr %s185, 32
        %s187 = scalar_lea.vmem [#allocation2], %s186
        %p188 = scmp.lt.s32.totalorder %s21, 1
        %s189 = scalar_select %p188, %s21, 1
        %p190 = scmp.lt.s32.totalorder %s22, 0
        %s191 = scalar_select %p190, %s22, 0
        %s192 = smul.addr %s191, 3
        %s193 = smul.addr %s189, 3
        %s194 = sadd.s32 %s192, %s193
        %s195 = smul.addr %s194, 4
        %s196 = scalar_lea.vmem %s0, %s195
        %s197 = smul.u32 2, %s22
        %v198 = vld [vmem:[%s196] sm:$0xff]
        %v199 = vld [vmem:[%s196 + $0x8] sm:$0xf]
        %v200 = vlaneseq
        %v201 = vand.u32 %v200, 127
        %v202 = vadd.s32 %v201, 128
        %vm203 = vcmp.lt.s32.totalorder %v201, 0
        %v204 = vsub.s32 0, %v201
        %v205 = vsel %vm203, %v204, %v201
        %v206 = vshrl.u32 %v205, 4
        %v207 = vand.u32 %v205, 15
        %v208 = vsub.s32 0, %v207
        %v209 = vsel %vm203, %v208, %v207
        %vm210 = vcmp.lt.s32.totalorder %v202, 0
        %v211 = vsub.s32 0, %v202
        %v212 = vsel %vm210, %v211, %v202
        %v213 = vshrl.u32 %v212, 4
        %v214 = vand.u32 %v212, 15
        %v215 = vsub.s32 0, %v214
        %v216 = vsel %vm210, %v215, %v214
        %vm217 = vcmp.ne.s32.totalorder %v209, 0
        %vm218 = vcmp.ne.s32.totalorder %v216, 0
        %vm219 = vcmp.lt.s32.totalorder %v209, 0
        %vm220 = vcmp.lt.s32.totalorder %v216, 0
        %vm221 = vmand %vm219, %vm217
        %vm222 = vmand %vm220, %vm218
        %v223 = vadd.s32 %v209, 16
        %v224 = vadd.s32 %v216, 16
        %v225 = vsel %vm221, %v223, %v209
        %v226 = vsel %vm222, %v224, %v216
        %vm227 = vcmp.gt.s32.totalorder %v225, 0
        %vm228 = vcmp.gt.s32.totalorder %v226, 0
        %vm229 = vcmp.lt.s32.totalorder %v225, 15
        %vm230 = vcmp.lt.s32.totalorder %v226, 15
        %v231 = vsel %vm227, 1, 0
        %v232 = vsel %vm228, 1, 0
        %vm233 = vcmp.eq.s32.totalorder %v231, 1
        %vm234 = vcmp.eq.s32.totalorder %v232, 1
        %236 = vst [vmem:[#allocation1] ss:$2 sm:$0xff] %v198
        %v237 = vld.sshfl [vmem:[#allocation1] sm:$0xff pattern:$0x75316420]
        %v238 = vld.sshfl [vmem:[#allocation1 + $0x8] sm:$0xff pattern:$0x75316420]
        %v241 = vsel %vm233, %v237, 0.0
        %v242 = vsel %vm234, %v238, 0.0
        %v243 = vld [vmem:[%s1] sm:$0xff]
        %v244 = vld [vmem:[%s1 + $0x8] sm:$0xff]
        %s245 = scalar_lea.vmem %s1, 16
        %v246 = vld [vmem:[%s245] sm:$0xff]
        %v247 = vld [vmem:[%s245 + $0x8] sm:$0xff]
        %249 = vst [vmem:[#allocation1] ss:$2 sm:$0xff] %v198
        %s250 = scalar_lea.vmem [#allocation1], 16
        %251 = vst [vmem:[%s250] ss:$2 sm:$0xff] %v199
        %v252 = vld.sshfl [vmem:[#allocation1] sm:$0xff pattern:$0x75316420]
        %v253 = vld.sshfl [vmem:[#allocation1 + $0x8] sm:$0xff pattern:$0x75316420]
        %v254 = vld.sshfl [vmem:[#allocation1 + $0x10] sm:$0xff pattern:$0x75316420]
        %255 = vrot.lane.b32.xlu0 %v252, 127
        %v256 = vpop.permute.xlu0 %255
        %257 = vrot.lane.b32.xlu0 %v253, 127
        %v258 = vpop.permute.xlu0 %257
        %259 = vrot.lane.b32.xlu0 %v254, 127
        %v260 = vpop.permute.xlu0 %259
        %vm261 = vcmask 1039360
        %v262 = vsel %vm261, %v256, %v258
        %v263 = vsel %vm261, %v258, %v260
        %vm264 = vcmask 31744
        %v266 = vsel %vm264, %v246, 0
        %v269 = vsel %vm264, %v247, 0
        %vm271 = vcmask 1043456
        %v272 = vsel %vm271, %v262, 0
        %v274 = vsel %vm271, %v263, 0
        %276 = vmatpush.msra.mxu0 0.0
        %277 = vmatpush.msra.mxu0 0.0
        %278 = vmatpush.msra.mxu0 0.0
        %279 = vmatpush.msra.mxu0 0.0
        %280 = vmatpush.msra.mxu0 0.0
        %281 = vmatpush.msra.mxu0 0.0
        %282 = vmatpush.msra.mxu0 0.0
        %283 = vmatpush.msra.mxu0 0.0
        %284 = vmatpush.msra.mxu0 0.0
        %285 = vmatpush.msra.mxu0 0.0
        %286 = vmatpush.msra.mxu0 0.0
        %287 = vmatpush.msra.mxu0 0.0
        %288 = vmatpush.msra.mxu0 0.0
        %289 = vmatpush.msra.mxu0 0.0
        %290 = vmatpush.msra.mxu0 0.0
        %291 = vmatpush.msra.mxu0 %v272
        %292 = vmatmul.f32.gmra.mxu0 %v266
        %v293 = vpop.f32.mrf.mxu0
        %v294 = vadd.f32 0.0, %v293
        %295 = vmatmul.f32.gmra.mxu0 %v269
        %v296 = vpop.f32.mrf.mxu0
        %v297 = vadd.f32 0.0, %v296
        %298 = vdwg.mxu0
        %299 = vmatpush.msra.mxu0 0.0
        %300 = vmatpush.msra.mxu0 0.0
        %301 = vmatpush.msra.mxu0 0.0
        %302 = vmatpush.msra.mxu0 0.0
        %303 = vmatpush.msra.mxu0 0.0
        %304 = vmatpush.msra.mxu0 0.0
        %305 = vmatpush.msra.mxu0 0.0
        %306 = vmatpush.msra.mxu0 0.0
        %307 = vmatpush.msra.mxu0 0.0
        %308 = vmatpush.msra.mxu0 0.0
        %309 = vmatpush.msra.mxu0 0.0
        %310 = vmatpush.msra.mxu0 0.0
        %311 = vmatpush.msra.mxu0 0.0
        %312 = vmatpush.msra.mxu0 0.0
        %313 = vmatpush.msra.mxu0 0.0
        %314 = vmatpush.msra.mxu0 %v274
        %315 = vmatmul.f32.gmra.mxu0 %v266
        %v316 = vpop.f32.mrf.mxu0
        %v317 = vadd.f32 0.0, %v316
        %318 = vmatmul.f32.gmra.mxu0 %v269
        %v319 = vpop.f32.mrf.mxu0
        %v320 = vadd.f32 0.0, %v319
        %321 = vdwg.mxu0
        %v323 = vsel %vm264, %v243, 0
        %v326 = vsel %vm264, %v244, 0
        %v329 = vsel %vm271, %v241, 0
        %v332 = vsel %vm271, %v242, 0
        %334 = vmatpush.msra.mxu0 0.0
        %335 = vmatpush.msra.mxu0 0.0
        %336 = vmatpush.msra.mxu0 0.0
        %337 = vmatpush.msra.mxu0 0.0
        %338 = vmatpush.msra.mxu0 0.0
        %339 = vmatpush.msra.mxu0 0.0
        %340 = vmatpush.msra.mxu0 0.0
        %341 = vmatpush.msra.mxu0 0.0
        %342 = vmatpush.msra.mxu0 0.0
        %343 = vmatpush.msra.mxu0 0.0
        %344 = vmatpush.msra.mxu0 0.0
        %345 = vmatpush.msra.mxu0 0.0
        %346 = vmatpush.msra.mxu0 0.0
        %347 = vmatpush.msra.mxu0 0.0
        %348 = vmatpush.msra.mxu0 0.0
        %349 = vmatpush.msra.mxu0 %v329
        %350 = vmatmul.f32.gmra.mxu0 %v323
        %v351 = vpop.f32.mrf.mxu0
        %v352 = vadd.f32 %v294, %v351
        %353 = vmatmul.f32.gmra.mxu0 %v326
        %v354 = vpop.f32.mrf.mxu0
        %v355 = vadd.f32 %v297, %v354
        %356 = vdwg.mxu0
        %357 = vmatpush.msra.mxu0 0.0
        %358 = vmatpush.msra.mxu0 0.0
        %359 = vmatpush.msra.mxu0 0.0
        %360 = vmatpush.msra.mxu0 0.0
        %361 = vmatpush.msra.mxu0 0.0
        %362 = vmatpush.msra.mxu0 0.0
        %363 = vmatpush.msra.mxu0 0.0
        %364 = vmatpush.msra.mxu0 0.0
        %365 = vmatpush.msra.mxu0 0.0
        %366 = vmatpush.msra.mxu0 0.0
        %367 = vmatpush.msra.mxu0 0.0
        %368 = vmatpush.msra.mxu0 0.0
        %369 = vmatpush.msra.mxu0 0.0
        %370 = vmatpush.msra.mxu0 0.0
        %371 = vmatpush.msra.mxu0 0.0
        %372 = vmatpush.msra.mxu0 %v332
        %373 = vmatmul.f32.gmra.mxu0 %v323
        %v374 = vpop.f32.mrf.mxu0
        %v375 = vadd.f32 %v317, %v374
        %376 = vmatmul.f32.gmra.mxu0 %v326
        %v377 = vpop.f32.mrf.mxu0
        %v378 = vadd.f32 %v320, %v377
        %379 = vdwg.mxu0
        %v380 = vsel %vm229, 1, 0
        %v381 = vsel %vm230, 1, 0
        %vm382 = vcmp.eq.s32.totalorder %v380, 1
        %vm383 = vcmp.eq.s32.totalorder %v381, 1
        %384 = vst [vmem:[#allocation1] ss:$2 sm:$0xff] %v198
        %s385 = scalar_lea.vmem [#allocation1], 16
        %386 = vst [vmem:[%s385] ss:$2 sm:$0xff] %v199
        %v387 = vld.sshfl [vmem:[#allocation1] sm:$0xff pattern:$0x75316420]
        %v388 = vld.sshfl [vmem:[#allocation1 + $0x8] sm:$0xff pattern:$0x75316420]
        %v389 = vld.sshfl [vmem:[#allocation1 + $0x10] sm:$0xff pattern:$0x75316420]
        %390 = vrot.lane.b32.xlu0 %v387, 126
        %v391 = vpop.permute.xlu0 %390
        %392 = vrot.lane.b32.xlu0 %v388, 126
        %v393 = vpop.permute.xlu0 %392
        %394 = vrot.lane.b32.xlu0 %v389, 126
        %v395 = vpop.permute.xlu0 %394
        %vm396 = vcmask 1031168
        %v397 = vsel %vm396, %v391, %v393
        %v398 = vsel %vm396, %v393, %v395
        %v401 = vsel %vm382, %v397, 0.0
        %v402 = vsel %vm383, %v398, 0.0
        %s403 = scalar_lea.vmem %s1, 32
        %v404 = vld [vmem:[%s403] sm:$0xff]
        %v405 = vld [vmem:[%s403 + $0x8] sm:$0xff]
        %v407 = vsel %vm264, %v404, 0
        %v410 = vsel %vm264, %v405, 0
        %v413 = vsel %vm271, %v401, 0
        %v416 = vsel %vm271, %v402, 0
        %418 = vmatpush.msra.mxu0 0.0
        %419 = vmatpush.msra.mxu0 0.0
        %420 = vmatpush.msra.mxu0 0.0
        %421 = vmatpush.msra.mxu0 0.0
        %422 = vmatpush.msra.mxu0 0.0
        %423 = vmatpush.msra.mxu0 0.0
        %424 = vmatpush.msra.mxu0 0.0
        %425 = vmatpush.msra.mxu0 0.0
        %426 = vmatpush.msra.mxu0 0.0
        %427 = vmatpush.msra.mxu0 0.0
        %428 = vmatpush.msra.mxu0 0.0
        %429 = vmatpush.msra.mxu0 0.0
        %430 = vmatpush.msra.mxu0 0.0
        %431 = vmatpush.msra.mxu0 0.0
        %432 = vmatpush.msra.mxu0 0.0
        %433 = vmatpush.msra.mxu0 %v413
        %434 = vmatmul.f32.gmra.mxu0 %v407
        %v435 = vpop.f32.mrf.mxu0
        %v436 = vadd.f32 0.0, %v435
        %437 = vmatmul.f32.gmra.mxu0 %v410
        %v438 = vpop.f32.mrf.mxu0
        %v439 = vadd.f32 0.0, %v438
        %440 = vdwg.mxu0
        %441 = vmatpush.msra.mxu0 0.0
        %442 = vmatpush.msra.mxu0 0.0
        %443 = vmatpush.msra.mxu0 0.0
        %444 = vmatpush.msra.mxu0 0.0
        %445 = vmatpush.msra.mxu0 0.0
        %446 = vmatpush.msra.mxu0 0.0
        %447 = vmatpush.msra.mxu0 0.0
        %448 = vmatpush.msra.mxu0 0.0
        %449 = vmatpush.msra.mxu0 0.0
        %450 = vmatpush.msra.mxu0 0.0
        %451 = vmatpush.msra.mxu0 0.0
        %452 = vmatpush.msra.mxu0 0.0
        %453 = vmatpush.msra.mxu0 0.0
        %454 = vmatpush.msra.mxu0 0.0
        %455 = vmatpush.msra.mxu0 0.0
        %456 = vmatpush.msra.mxu0 %v416
        %457 = vmatmul.f32.gmra.mxu0 %v407
        %v458 = vpop.f32.mrf.mxu0
        %v459 = vadd.f32 0.0, %v458
        %460 = vmatmul.f32.gmra.mxu0 %v410
        %v461 = vpop.f32.mrf.mxu0
        %v462 = vadd.f32 0.0, %v461
        %463 = vdwg.mxu0
        %v464 = vadd.f32 %v352, %v436
        %v465 = vadd.f32 %v375, %v459
        %v466 = vadd.f32 %v355, %v439
        %v467 = vadd.f32 %v378, %v462
        %468 = vst [vmem:[#allocation1] ss:$2 sm:$0xff] %v198
        %s469 = scalar_lea.vmem [#allocation1], 16
        %470 = vst [vmem:[%s469] ss:$2 sm:$0xff] %v199
        %v471 = vld.sshfl [vmem:[#allocation1] sm:$0xff pattern:$0x75316420]
        %v472 = vld.sshfl [vmem:[#allocation1 + $0x8] sm:$0xff pattern:$0x75316420]
        %v473 = vld.sshfl [vmem:[#allocation1 + $0x10] sm:$0xff pattern:$0x75316420]
        %474 = vrot.lane.b32.xlu0 %v471, 112
        %v475 = vpop.permute.xlu0 %474
        %476 = vrot.lane.b32.xlu0 %v472, 112
        %v477 = vpop.permute.xlu0 %476
        %478 = vrot.lane.b32.xlu0 %v473, 112
        %v479 = vpop.permute.xlu0 %478
        %vm480 = vcmask 916480
        %v481 = vsel %vm480, %v475, %v477
        %v482 = vsel %vm480, %v477, %v479
        %v485 = vsel %vm233, %v481, 0.0
        %v486 = vsel %vm234, %v482, 0.0
        %s487 = scalar_lea.vmem %s1, 48
        %v488 = vld [vmem:[%s487] sm:$0xff]
        %v489 = vld [vmem:[%s487 + $0x8] sm:$0xff]
        %v491 = vsel %vm264, %v488, 0
        %v494 = vsel %vm264, %v489, 0
        %v497 = vsel %vm271, %v485, 0
        %v500 = vsel %vm271, %v486, 0
        %502 = vmatpush.msra.mxu0 0.0
        %503 = vmatpush.msra.mxu0 0.0
        %504 = vmatpush.msra.mxu0 0.0
        %505 = vmatpush.msra.mxu0 0.0
        %506 = vmatpush.msra.mxu0 0.0
        %507 = vmatpush.msra.mxu0 0.0
        %508 = vmatpush.msra.mxu0 0.0
        %509 = vmatpush.msra.mxu0 0.0
        %510 = vmatpush.msra.mxu0 0.0
        %511 = vmatpush.msra.mxu0 0.0
        %512 = vmatpush.msra.mxu0 0.0
        %513 = vmatpush.msra.mxu0 0.0
        %514 = vmatpush.msra.mxu0 0.0
        %515 = vmatpush.msra.mxu0 0.0
        %516 = vmatpush.msra.mxu0 0.0
        %517 = vmatpush.msra.mxu0 %v497
        %518 = vmatmul.f32.gmra.mxu0 %v491
        %v519 = vpop.f32.mrf.mxu0
        %v520 = vadd.f32 0.0, %v519
        %521 = vmatmul.f32.gmra.mxu0 %v494
        %v522 = vpop.f32.mrf.mxu0
        %v523 = vadd.f32 0.0, %v522
        %524 = vdwg.mxu0
        %525 = vmatpush.msra.mxu0 0.0
        %526 = vmatpush.msra.mxu0 0.0
        %527 = vmatpush.msra.mxu0 0.0
        %528 = vmatpush.msra.mxu0 0.0
        %529 = vmatpush.msra.mxu0 0.0
        %530 = vmatpush.msra.mxu0 0.0
        %531 = vmatpush.msra.mxu0 0.0
        %532 = vmatpush.msra.mxu0 0.0
        %533 = vmatpush.msra.mxu0 0.0
        %534 = vmatpush.msra.mxu0 0.0
        %535 = vmatpush.msra.mxu0 0.0
        %536 = vmatpush.msra.mxu0 0.0
        %537 = vmatpush.msra.mxu0 0.0
        %538 = vmatpush.msra.mxu0 0.0
        %539 = vmatpush.msra.mxu0 0.0
        %540 = vmatpush.msra.mxu0 %v500
        %541 = vmatmul.f32.gmra.mxu0 %v491
        %v542 = vpop.f32.mrf.mxu0
        %v543 = vadd.f32 0.0, %v542
        %544 = vmatmul.f32.gmra.mxu0 %v494
        %v545 = vpop.f32.mrf.mxu0
        %v546 = vadd.f32 0.0, %v545
        %547 = vdwg.mxu0
        %v548 = vadd.f32 %v464, %v520
        %v549 = vadd.f32 %v465, %v543
        %v550 = vadd.f32 %v466, %v523
        %v551 = vadd.f32 %v467, %v546
        %s552 = scalar_lea.vmem %s1, 64
        %v553 = vld [vmem:[%s552] sm:$0xff]
        %v554 = vld [vmem:[%s552 + $0x8] sm:$0xff]
        %555 = vst [vmem:[#allocation1] ss:$2 sm:$0xff] %v198
        %s556 = scalar_lea.vmem [#allocation1], 16
        %557 = vst [vmem:[%s556] ss:$2 sm:$0xff] %v199
        %v558 = vld.sshfl [vmem:[#allocation1] sm:$0xff pattern:$0x75316420]
        %v559 = vld.sshfl [vmem:[#allocation1 + $0x8] sm:$0xff pattern:$0x75316420]
        %v560 = vld.sshfl [vmem:[#allocation1 + $0x10] sm:$0xff pattern:$0x75316420]
        %561 = vrot.lane.b32.xlu0 %v558, 111
        %v562 = vpop.permute.xlu0 %561
        %563 = vrot.lane.b32.xlu0 %v559, 111
        %v564 = vpop.permute.xlu0 %563
        %565 = vrot.lane.b32.xlu0 %v560, 111
        %v566 = vpop.permute.xlu0 %565
        %vm567 = vcmask 908288
        %v568 = vsel %vm567, %v562, %v564
        %v569 = vsel %vm567, %v564, %v566
        %v571 = vsel %vm264, %v553, 0
        %v574 = vsel %vm264, %v554, 0
        %v576 = vsel %vm271, %v568, 0
        %v578 = vsel %vm271, %v569, 0
        %580 = vmatpush.msra.mxu0 0.0
        %581 = vmatpush.msra.mxu0 0.0
        %582 = vmatpush.msra.mxu0 0.0
        %583 = vmatpush.msra.mxu0 0.0
        %584 = vmatpush.msra.mxu0 0.0
        %585 = vmatpush.msra.mxu0 0.0
        %586 = vmatpush.msra.mxu0 0.0
        %587 = vmatpush.msra.mxu0 0.0
        %588 = vmatpush.msra.mxu0 0.0
        %589 = vmatpush.msra.mxu0 0.0
        %590 = vmatpush.msra.mxu0 0.0
        %591 = vmatpush.msra.mxu0 0.0
        %592 = vmatpush.msra.mxu0 0.0
        %593 = vmatpush.msra.mxu0 0.0
        %594 = vmatpush.msra.mxu0 0.0
        %595 = vmatpush.msra.mxu0 %v576
        %596 = vmatmul.f32.gmra.mxu0 %v571
        %v597 = vpop.f32.mrf.mxu0
        %v598 = vadd.f32 0.0, %v597
        %599 = vmatmul.f32.gmra.mxu0 %v574
        %v600 = vpop.f32.mrf.mxu0
        %v601 = vadd.f32 0.0, %v600
        %602 = vdwg.mxu0
        %603 = vmatpush.msra.mxu0 0.0
        %604 = vmatpush.msra.mxu0 0.0
        %605 = vmatpush.msra.mxu0 0.0
        %606 = vmatpush.msra.mxu0 0.0
        %607 = vmatpush.msra.mxu0 0.0
        %608 = vmatpush.msra.mxu0 0.0
        %609 = vmatpush.msra.mxu0 0.0
        %610 = vmatpush.msra.mxu0 0.0
        %611 = vmatpush.msra.mxu0 0.0
        %612 = vmatpush.msra.mxu0 0.0
        %613 = vmatpush.msra.mxu0 0.0
        %614 = vmatpush.msra.mxu0 0.0
        %615 = vmatpush.msra.mxu0 0.0
        %616 = vmatpush.msra.mxu0 0.0
        %617 = vmatpush.msra.mxu0 0.0
        %618 = vmatpush.msra.mxu0 %v578
        %619 = vmatmul.f32.gmra.mxu0 %v571
        %v620 = vpop.f32.mrf.mxu0
        %v621 = vadd.f32 0.0, %v620
        %622 = vmatmul.f32.gmra.mxu0 %v574
        %v623 = vpop.f32.mrf.mxu0
        %v624 = vadd.f32 0.0, %v623
        %625 = vdwg.mxu0
        %v626 = vadd.f32 %v548, %v598
        %v627 = vadd.f32 %v549, %v621
        %v628 = vadd.f32 %v550, %v601
        %v629 = vadd.f32 %v551, %v624
        %630 = vst [vmem:[#allocation1] ss:$2 sm:$0xff] %v198
        %s631 = scalar_lea.vmem [#allocation1], 16
        %632 = vst [vmem:[%s631] ss:$2 sm:$0xff] %v199
        %v633 = vld.sshfl [vmem:[#allocation1] sm:$0xff pattern:$0x75316420]
        %v634 = vld.sshfl [vmem:[#allocation1 + $0x8] sm:$0xff pattern:$0x75316420]
        %v635 = vld.sshfl [vmem:[#allocation1 + $0x10] sm:$0xff pattern:$0x75316420]
        %636 = vrot.lane.b32.xlu0 %v633, 110
        %v637 = vpop.permute.xlu0 %636
        %638 = vrot.lane.b32.xlu0 %v634, 110
        %v639 = vpop.permute.xlu0 %638
        %640 = vrot.lane.b32.xlu0 %v635, 110
        %v641 = vpop.permute.xlu0 %640
        %vm642 = vcmask 900096
        %v643 = vsel %vm642, %v637, %v639
        %v644 = vsel %vm642, %v639, %v641
        %v647 = vsel %vm382, %v643, 0.0
        %v648 = vsel %vm383, %v644, 0.0
        %s649 = scalar_lea.vmem %s1, 80
        %v650 = vld [vmem:[%s649] sm:$0xff]
        %v651 = vld [vmem:[%s649 + $0x8] sm:$0xff]
        %v653 = vsel %vm264, %v650, 0
        %v656 = vsel %vm264, %v651, 0
        %v659 = vsel %vm271, %v647, 0
        %v662 = vsel %vm271, %v648, 0
        %664 = vmatpush.msra.mxu0 0.0
        %665 = vmatpush.msra.mxu0 0.0
        %666 = vmatpush.msra.mxu0 0.0
        %667 = vmatpush.msra.mxu0 0.0
        %668 = vmatpush.msra.mxu0 0.0
        %669 = vmatpush.msra.mxu0 0.0
        %670 = vmatpush.msra.mxu0 0.0
        %671 = vmatpush.msra.mxu0 0.0
        %672 = vmatpush.msra.mxu0 0.0
        %673 = vmatpush.msra.mxu0 0.0
        %674 = vmatpush.msra.mxu0 0.0
        %675 = vmatpush.msra.mxu0 0.0
        %676 = vmatpush.msra.mxu0 0.0
        %677 = vmatpush.msra.mxu0 0.0
        %678 = vmatpush.msra.mxu0 0.0
        %679 = vmatpush.msra.mxu0 %v659
        %680 = vmatmul.f32.gmra.mxu0 %v653
        %v681 = vpop.f32.mrf.mxu0
        %v682 = vadd.f32 0.0, %v681
        %683 = vmatmul.f32.gmra.mxu0 %v656
        %v684 = vpop.f32.mrf.mxu0
        %v685 = vadd.f32 0.0, %v684
        %686 = vdwg.mxu0
        %687 = vmatpush.msra.mxu0 0.0
        %688 = vmatpush.msra.mxu0 0.0
        %689 = vmatpush.msra.mxu0 0.0
        %690 = vmatpush.msra.mxu0 0.0
        %691 = vmatpush.msra.mxu0 0.0
        %692 = vmatpush.msra.mxu0 0.0
        %693 = vmatpush.msra.mxu0 0.0
        %694 = vmatpush.msra.mxu0 0.0
        %695 = vmatpush.msra.mxu0 0.0
        %696 = vmatpush.msra.mxu0 0.0
        %697 = vmatpush.msra.mxu0 0.0
        %698 = vmatpush.msra.mxu0 0.0
        %699 = vmatpush.msra.mxu0 0.0
        %700 = vmatpush.msra.mxu0 0.0
        %701 = vmatpush.msra.mxu0 0.0
        %702 = vmatpush.msra.mxu0 %v662
        %703 = vmatmul.f32.gmra.mxu0 %v653
        %v704 = vpop.f32.mrf.mxu0
        %v705 = vadd.f32 0.0, %v704
        %706 = vmatmul.f32.gmra.mxu0 %v656
        %v707 = vpop.f32.mrf.mxu0
        %v708 = vadd.f32 0.0, %v707
        %709 = vdwg.mxu0
        %v710 = vadd.f32 %v626, %v682
        %v711 = vadd.f32 %v627, %v705
        %v712 = vadd.f32 %v628, %v685
        %v713 = vadd.f32 %v629, %v708
        %714 = vst [vmem:[#allocation1] ss:$2 sm:$0xff] %v198
        %s715 = scalar_lea.vmem [#allocation1], 16
        %716 = vst [vmem:[%s715] ss:$2 sm:$0xff] %v199
        %v717 = vld.sshfl [vmem:[#allocation1] sm:$0xff pattern:$0x75316420]
        %v718 = vld.sshfl [vmem:[#allocation1 + $0x8] sm:$0xff pattern:$0x75316420]
        %v719 = vld.sshfl [vmem:[#allocation1 + $0x10] sm:$0xff pattern:$0x75316420]
        %720 = vrot.lane.b32.xlu0 %v717, 96
        %v721 = vpop.permute.xlu0 %720
        %722 = vrot.lane.b32.xlu0 %v718, 96
        %v723 = vpop.permute.xlu0 %722
        %724 = vrot.lane.b32.xlu0 %v719, 96
        %v725 = vpop.permute.xlu0 %724
        %vm726 = vcmask 785408
        %v727 = vsel %vm726, %v721, %v723
        %v728 = vsel %vm726, %v723, %v725
        %v731 = vsel %vm233, %v727, 0.0
        %v732 = vsel %vm234, %v728, 0.0
        %s733 = scalar_lea.vmem %s1, 96
        %v734 = vld [vmem:[%s733] sm:$0xff]
        %v735 = vld [vmem:[%s733 + $0x8] sm:$0xff]
        %v737 = vsel %vm264, %v734, 0
        %v740 = vsel %vm264, %v735, 0
        %v743 = vsel %vm271, %v731, 0
        %v746 = vsel %vm271, %v732, 0
        %748 = vmatpush.msra.mxu0 0.0
        %749 = vmatpush.msra.mxu0 0.0
        %750 = vmatpush.msra.mxu0 0.0
        %751 = vmatpush.msra.mxu0 0.0
        %752 = vmatpush.msra.mxu0 0.0
        %753 = vmatpush.msra.mxu0 0.0
        %754 = vmatpush.msra.mxu0 0.0
        %755 = vmatpush.msra.mxu0 0.0
        %756 = vmatpush.msra.mxu0 0.0
        %757 = vmatpush.msra.mxu0 0.0
        %758 = vmatpush.msra.mxu0 0.0
        %759 = vmatpush.msra.mxu0 0.0
        %760 = vmatpush.msra.mxu0 0.0
        %761 = vmatpush.msra.mxu0 0.0
        %762 = vmatpush.msra.mxu0 0.0
        %763 = vmatpush.msra.mxu0 %v743
        %764 = vmatmul.f32.gmra.mxu0 %v737
        %v765 = vpop.f32.mrf.mxu0
        %v766 = vadd.f32 0.0, %v765
        %767 = vmatmul.f32.gmra.mxu0 %v740
        %v768 = vpop.f32.mrf.mxu0
        %v769 = vadd.f32 0.0, %v768
        %770 = vdwg.mxu0
        %771 = vmatpush.msra.mxu0 0.0
        %772 = vmatpush.msra.mxu0 0.0
        %773 = vmatpush.msra.mxu0 0.0
        %774 = vmatpush.msra.mxu0 0.0
        %775 = vmatpush.msra.mxu0 0.0
        %776 = vmatpush.msra.mxu0 0.0
        %777 = vmatpush.msra.mxu0 0.0
        %778 = vmatpush.msra.mxu0 0.0
        %779 = vmatpush.msra.mxu0 0.0
        %780 = vmatpush.msra.mxu0 0.0
        %781 = vmatpush.msra.mxu0 0.0
        %782 = vmatpush.msra.mxu0 0.0
        %783 = vmatpush.msra.mxu0 0.0
        %784 = vmatpush.msra.mxu0 0.0
        %785 = vmatpush.msra.mxu0 0.0
        %786 = vmatpush.msra.mxu0 %v746
        %787 = vmatmul.f32.gmra.mxu0 %v737
        %v788 = vpop.f32.mrf.mxu0
        %v789 = vadd.f32 0.0, %v788
        %790 = vmatmul.f32.gmra.mxu0 %v740
        %v791 = vpop.f32.mrf.mxu0
        %v792 = vadd.f32 0.0, %v791
        %793 = vdwg.mxu0
        %v794 = vadd.f32 %v710, %v766
        %v795 = vadd.f32 %v711, %v789
        %v796 = vadd.f32 %v712, %v769
        %v797 = vadd.f32 %v713, %v792
        %s798 = scalar_lea.vmem %s1, 112
        %v799 = vld [vmem:[%s798] sm:$0xff]
        %v800 = vld [vmem:[%s798 + $0x8] sm:$0xff]
        %801 = vst [vmem:[#allocation1] ss:$2 sm:$0xff] %v198
        %s802 = scalar_lea.vmem [#allocation1], 16
        %803 = vst [vmem:[%s802] ss:$2 sm:$0xff] %v199
        %v804 = vld.sshfl [vmem:[#allocation1] sm:$0xff pattern:$0x75316420]
        %v805 = vld.sshfl [vmem:[#allocation1 + $0x8] sm:$0xff pattern:$0x75316420]
        %v806 = vld.sshfl [vmem:[#allocation1 + $0x10] sm:$0xff pattern:$0x75316420]
        %807 = vrot.lane.b32.xlu0 %v804, 95
        %v808 = vpop.permute.xlu0 %807
        %809 = vrot.lane.b32.xlu0 %v805, 95
        %v810 = vpop.permute.xlu0 %809
        %811 = vrot.lane.b32.xlu0 %v806, 95
        %v812 = vpop.permute.xlu0 %811
        %vm813 = vcmask 777216
        %v814 = vsel %vm813, %v808, %v810
        %v815 = vsel %vm813, %v810, %v812
        %v817 = vsel %vm264, %v799, 0
        %v820 = vsel %vm264, %v800, 0
        %v822 = vsel %vm271, %v814, 0
        %v824 = vsel %vm271, %v815, 0
        %826 = vmatpush.msra.mxu0 0.0
        %827 = vmatpush.msra.mxu0 0.0
        %828 = vmatpush.msra.mxu0 0.0
        %829 = vmatpush.msra.mxu0 0.0
        %830 = vmatpush.msra.mxu0 0.0
        %831 = vmatpush.msra.mxu0 0.0
        %832 = vmatpush.msra.mxu0 0.0
        %833 = vmatpush.msra.mxu0 0.0
        %834 = vmatpush.msra.mxu0 0.0
        %835 = vmatpush.msra.mxu0 0.0
        %836 = vmatpush.msra.mxu0 0.0
        %837 = vmatpush.msra.mxu0 0.0
        %838 = vmatpush.msra.mxu0 0.0
        %839 = vmatpush.msra.mxu0 0.0
        %840 = vmatpush.msra.mxu0 0.0
        %841 = vmatpush.msra.mxu0 %v822
        %842 = vmatmul.f32.gmra.mxu0 %v817
        %v843 = vpop.f32.mrf.mxu0
        %v844 = vadd.f32 0.0, %v843
        %845 = vmatmul.f32.gmra.mxu0 %v820
        %v846 = vpop.f32.mrf.mxu0
        %v847 = vadd.f32 0.0, %v846
        %848 = vdwg.mxu0
        %849 = vmatpush.msra.mxu0 0.0
        %850 = vmatpush.msra.mxu0 0.0
        %851 = vmatpush.msra.mxu0 0.0
        %852 = vmatpush.msra.mxu0 0.0
        %853 = vmatpush.msra.mxu0 0.0
        %854 = vmatpush.msra.mxu0 0.0
        %855 = vmatpush.msra.mxu0 0.0
        %856 = vmatpush.msra.mxu0 0.0
        %857 = vmatpush.msra.mxu0 0.0
        %858 = vmatpush.msra.mxu0 0.0
        %859 = vmatpush.msra.mxu0 0.0
        %860 = vmatpush.msra.mxu0 0.0
        %861 = vmatpush.msra.mxu0 0.0
        %862 = vmatpush.msra.mxu0 0.0
        %863 = vmatpush.msra.mxu0 0.0
        %864 = vmatpush.msra.mxu0 %v824
        %865 = vmatmul.f32.gmra.mxu0 %v817
        %v866 = vpop.f32.mrf.mxu0
        %v867 = vadd.f32 0.0, %v866
        %868 = vmatmul.f32.gmra.mxu0 %v820
        %v869 = vpop.f32.mrf.mxu0
        %v870 = vadd.f32 0.0, %v869
        %871 = vdwg.mxu0
        %v872 = vadd.f32 %v794, %v844
        %v873 = vadd.f32 %v795, %v867
        %v874 = vadd.f32 %v796, %v847
        %v875 = vadd.f32 %v797, %v870
        %876 = vst [vmem:[#allocation1] ss:$2 sm:$0xff] %v198
        %s877 = scalar_lea.vmem [#allocation1], 16
        %878 = vst [vmem:[%s877] ss:$2 sm:$0xff] %v199
        %v879 = vld.sshfl [vmem:[#allocation1] sm:$0xff pattern:$0x75316420]
        %v880 = vld.sshfl [vmem:[#allocation1 + $0x8] sm:$0xff pattern:$0x75316420]
        %v881 = vld.sshfl [vmem:[#allocation1 + $0x10] sm:$0xff pattern:$0x75316420]
        %882 = vrot.lane.b32.xlu0 %v879, 94
        %v883 = vpop.permute.xlu0 %882
        %884 = vrot.lane.b32.xlu0 %v880, 94
        %v885 = vpop.permute.xlu0 %884
        %886 = vrot.lane.b32.xlu0 %v881, 94
        %v887 = vpop.permute.xlu0 %886
        %vm888 = vcmask 769024
        %v889 = vsel %vm888, %v883, %v885
        %v890 = vsel %vm888, %v885, %v887
        %v893 = vsel %vm382, %v889, 0.0
        %v894 = vsel %vm383, %v890, 0.0
        %s895 = scalar_lea.vmem %s1, 128
        %v896 = vld [vmem:[%s895] sm:$0xff]
        %v897 = vld [vmem:[%s895 + $0x8] sm:$0xff]
        %v899 = vsel %vm264, %v896, 0
        %v902 = vsel %vm264, %v897, 0
        %v905 = vsel %vm271, %v893, 0
        %v908 = vsel %vm271, %v894, 0
        %910 = vmatpush.msra.mxu0 0.0
        %911 = vmatpush.msra.mxu0 0.0
        %912 = vmatpush.msra.mxu0 0.0
        %913 = vmatpush.msra.mxu0 0.0
        %914 = vmatpush.msra.mxu0 0.0
        %915 = vmatpush.msra.mxu0 0.0
        %916 = vmatpush.msra.mxu0 0.0
        %917 = vmatpush.msra.mxu0 0.0
        %918 = vmatpush.msra.mxu0 0.0
        %919 = vmatpush.msra.mxu0 0.0
        %920 = vmatpush.msra.mxu0 0.0
        %921 = vmatpush.msra.mxu0 0.0
        %922 = vmatpush.msra.mxu0 0.0
        %923 = vmatpush.msra.mxu0 0.0
        %924 = vmatpush.msra.mxu0 0.0
        %925 = vmatpush.msra.mxu0 %v905
        %926 = vmatmul.f32.gmra.mxu0 %v899
        %v927 = vpop.f32.mrf.mxu0
        %v928 = vadd.f32 0.0, %v927
        %929 = vmatmul.f32.gmra.mxu0 %v902
        %v930 = vpop.f32.mrf.mxu0
        %v931 = vadd.f32 0.0, %v930
        %932 = vdwg.mxu0
        %933 = vmatpush.msra.mxu0 0.0
        %934 = vmatpush.msra.mxu0 0.0
        %935 = vmatpush.msra.mxu0 0.0
        %936 = vmatpush.msra.mxu0 0.0
        %937 = vmatpush.msra.mxu0 0.0
        %938 = vmatpush.msra.mxu0 0.0
        %939 = vmatpush.msra.mxu0 0.0
        %940 = vmatpush.msra.mxu0 0.0
        %941 = vmatpush.msra.mxu0 0.0
        %942 = vmatpush.msra.mxu0 0.0
        %943 = vmatpush.msra.mxu0 0.0
        %944 = vmatpush.msra.mxu0 0.0
        %945 = vmatpush.msra.mxu0 0.0
        %946 = vmatpush.msra.mxu0 0.0
        %947 = vmatpush.msra.mxu0 0.0
        %948 = vmatpush.msra.mxu0 %v908
        %949 = vmatmul.f32.gmra.mxu0 %v899
        %v950 = vpop.f32.mrf.mxu0
        %v951 = vadd.f32 0.0, %v950
        %952 = vmatmul.f32.gmra.mxu0 %v902
        %v953 = vpop.f32.mrf.mxu0
        %v954 = vadd.f32 0.0, %v953
        %955 = vdwg.mxu0
        %v956 = vadd.f32 %v872, %v928
        %v957 = vadd.f32 %v873, %v951
        %v958 = vadd.f32 %v874, %v931
        %v959 = vadd.f32 %v875, %v954
        %v960 = vld [vmem:[%s2] sm:$0xff]
        %v961 = vld [vmem:[%s2 + $0x8] sm:$0xff]
        %963 = vset.pattern.permute.xlu0 0
        %964 = vperm.xlu0 %963, %v960
        %v965 = vpop.permute.xlu0 %964
        %968 = vset.pattern.permute.xlu0 0
        %969 = vperm.xlu0 %968, %v961
        %v970 = vpop.permute.xlu0 %969
        %v972 = vadd.f32 %v956, %v965
        %v973 = vadd.f32 %v957, %v965
        %v974 = vadd.f32 %v958, %v970
        %v975 = vadd.f32 %v959, %v970
        %976 = vst [vmem:[%s187] sm:$0xff] %v972
        %977 = vst [vmem:[%s187 + $0x8] sm:$0xff] %v973
        %978 = vst [vmem:[%s187 + $0x10] sm:$0xff] %v974
        %979 = vst [vmem:[%s187 + $0x18] sm:$0xff] %v975
        %s980 = sand.u32 %s109, 1
        %s981 = scalar_lea.sflag [#allocation3], %s980
        %s982 = sand.u32 %s109, 1
        %s983 = smul.addr %s982, 32
        %s984 = scalar_lea.vmem [#allocation2], %s983
        // Predicated region
        $region33: #{tpu_custom_call.1} parent=31 // pred_check
          %p985 = pneg %p119
        $region34: #{tpu_custom_call.1} parent=31 // pred_check_branch
          %987 = sbr.rel (%p985) target = $region36
        $region35: #{tpu_custom_call.1} parent=31 // pred_region
          %s988 = smul.u32 2, %s22
          %990 = vsyncadd %s981, 0
          %s991 = smul.addr %s21, 4
          %s992 = sadd.s32 %s988, %s991
          %s993 = smul.addr %s992, 8
          %s994 = scalar_lea.hbm %s3, %s993
          %s995 = sshll.u32 %s984, 4
          %s996 = int_to_ptr.vmem [resolvable:$true] %s995
          %s997 = sshll.u32 %s994, 4
          %s998 = int_to_ptr.hbm [resolvable:$true] %s997
          %1003 = dma.vmem_to_hbm [thread:$0]  %s996, 512, %s998, %s981, 256, 256, 16
        $region36: #{tpu_custom_call.1} parent=31 // pred_fallthru
          _
      $region32: #{tpu_custom_call.1} parent=5 // pred_fallthru
        _
      %p1004 = scmp.le.s32.totalorder 2, %s12
      // Predicated region
      $region37: #{tpu_custom_call.1} parent=5 // pred_check
        %p1005 = pneg %p1004
      $region38: #{tpu_custom_call.1} parent=5 // pred_check_branch
        %1007 = sbr.rel (%p1005) target = $region40
      $region39: #{tpu_custom_call.1} parent=5 // pred_region
        %s1008 = ssub.s32 %s12, 2
        // Predicated region
        $region41: #{tpu_custom_call.1} parent=39 // pred_check
          %p1009 = pneg %p125
        $region42: #{tpu_custom_call.1} parent=39 // pred_check_branch
          %1011 = sbr.rel (%p1009) target = $region44
        $region43: #{tpu_custom_call.1} parent=39 // pred_region
          %s1012 = sand.u32 %s110, 1
          %s1013 = scalar_lea.sflag [#allocation3], %s1012
          %s1014 = sand.u32 %s110, 1
          %s1015 = smul.addr %s1014, 32
          %s1016 = scalar_lea.vmem [#allocation2], %s1015
          %1018 = dma.done %s1013, 512
        $region44: #{tpu_custom_call.1} parent=39 // pred_fallthru
          _
      $region40: #{tpu_custom_call.1} parent=5 // pred_fallthru
        _
    $region6: #{tpu_custom_call.1} parent=1 // loop_footer
      %s16 = sadd.s32 1, %s12
    $region7: #{tpu_custom_call.1} parent=1 // loop_footer_branch
      %11 = sbr.rel target = $region3
    $region8: #{tpu_custom_call.1} parent=1 // loop_exit
      _
    %1019 = vsyncpa [#allocation3], 1
    %s1020 = scalar_lea.sflag [#allocation3], 1
    %1021 = vsyncpa %s1020, 1

</llo_original>
